<compile_context>
chip_gen: v5e
topology: v5e:2x2
jax: 0.10.0
libtpu: 0.0.40
codegen_flags: <defaults>
</compile_context>

<pallas_src>
import functools

import jax
import jax.numpy as jnp
from jax import lax
from jax.experimental import pallas as pl
from jax.experimental.pallas import tpu as pltpu


def _pick_tile(n, preferred=128):
    """Largest preferred tile that divides `n`, else the full dimension.

    128 is MXU-native on every TPU generation (v5e 4x128x128; v6e/v7x accept
    it); pass 256/512 explicitly to genetic_step for peak v6e/v7x utilization.
    """
    return preferred if (n % preferred == 0) else n


# --------------------------------------------------------------------------
# Kernel 1: tiled pairwise (squared) Euclidean distances.
# --------------------------------------------------------------------------
def _pairwise_dist_kernel(a_ref, b_ref, dist_ref, acc_ref, *,
                          take_sqrt, matmul_dtype):
    k = pl.program_id(2)

    @pl.when(k == 0)
    def _():
        acc_ref[...] = jnp.zeros_like(acc_ref)

    a = a_ref[...].astype(jnp.float32)          # (tm, tk)
    b = b_ref[...].astype(jnp.float32)          # (tn, tk)

    # ||a - b||^2 accumulated per K chunk: |a_k|^2 + |b_k|^2 - 2 a_k . b_k
    # dot_general contracts axis 1 of both operands -> feeds MXU directly,
    # no materialized transpose of the population tile.
    am = a if matmul_dtype is None else a.astype(matmul_dtype)
    bm = b if matmul_dtype is None else b.astype(matmul_dtype)
    gram = lax.dot_general(am, bm, (((1,), (1,)), ((), ())),
                           preferred_element_type=jnp.float32)   # (tm, tn)
    sq_a = jnp.sum(a * a, axis=1, keepdims=True)                 # (tm, 1)
    sq_b = jnp.sum(b * b, axis=1, keepdims=True)                 # (tn, 1)
    acc_ref[...] += (sq_a - 2.0 * gram) + sq_b.T

    @pl.when(k == pl.num_programs(2) - 1)
    def _():
        d2 = jnp.maximum(acc_ref[...], 0.0)
        dist_ref[...] = (jnp.sqrt(d2) if take_sqrt else d2).astype(dist_ref.dtype)


# --------------------------------------------------------------------------
# Kernel 2: per-row-block mutation + crossover.
# --------------------------------------------------------------------------
def _children_kernel(pop_ref, pop_partner_ref, rand_ref, rand_partner_ref,
                     child_ref, *, p_mutate, p_crossover):
    p_mut = jnp.float32(p_mutate)
    p_xo = jnp.float32(p_crossover)

    def mutate(pop_f32, u):
        # u: (3, tm, D) uniforms in [0, 1); u[0] gates mutation, u[1] is noise.
        noise = u[1] * 2.0 - 1.0                      # uniform in [-1, 1)
        return jnp.where(u[0] < p_mut, pop_f32 + noise, pop_f32)

    x = pop_ref[...].astype(jnp.float32)              # (tm, D)
    xp = pop_partner_ref[...].astype(jnp.float32)     # (tm, D) rotated rows
    u = rand_ref[...]                                 # (3, tm, D)
    up = rand_partner_ref[...]                        # (3, tm, D)

    mutated = mutate(x, u)
    partner = mutate(xp, up)   # partner = already-mutated rotated population
    child_ref[...] = jnp.where(u[2] < p_xo, partner, mutated).astype(child_ref.dtype)


# --------------------------------------------------------------------------
# Wrapper.
# --------------------------------------------------------------------------
def genetic_step(population, rng_key, *, p_mutate, p_crossover,
                 distance_metric="euclidean",
                 tm=None, tn=None, tk=None, matmul_dtype=None):
    """One genetic-search generation: pairwise distances + mutation/crossover.

    tm/tn tile population rows of the (P, P) distance grid, tk tiles the gene
    (reduction) axis.  Defaults are 128 (fits well inside the 32 MiB scoped
    VMEM default on all generations, incl. v7x's 64 MiB physical); use 256/512
    on v6e/v7x and set matmul_dtype=jnp.bfloat16 there for the bf16 MXU path
    (accumulation stays f32).
    """
    P, D = population.shape
    tm = _pick_tile(P) if tm is None else tm
    tn = _pick_tile(P) if tn is None else tn
    tk = _pick_tile(D) if tk is None else tk
    assert P % tm == 0 and P % tn == 0 and D % tk == 0, "tiles must divide (P, D)"

    take_sqrt = (distance_metric == "euclidean")      # else squared euclidean

    dist = pl.pallas_call(
        functools.partial(_pairwise_dist_kernel, take_sqrt=take_sqrt,
                          matmul_dtype=matmul_dtype),
        grid=(P // tm, P // tn, D // tk),
        in_specs=[
            pl.BlockSpec((tm, tk), lambda i, j, k: (i, k)),
            pl.BlockSpec((tn, tk), lambda i, j, k: (j, k)),
        ],
        out_specs=pl.BlockSpec((tm, tn), lambda i, j, k: (i, j)),
        out_shape=jax.ShapeDtypeStruct((P, P), jnp.float32),
        scratch_shapes=[pltpu.VMEM((tm, tn), jnp.float32)],
        compiler_params=pltpu.CompilerParams(
            dimension_semantics=("parallel", "parallel", "arbitrary")),
        cost_estimate=pl.CostEstimate(
            flops=2 * P * P * D,
            transcendentals=P * P if take_sqrt else 0,
            bytes_accessed=(2 * P * D + P * P) * 4),
    )(population, population)

    # ---- mutation / crossover over row blocks ------------------------------
    # TODO(synk): on real TPU HW the three uniform draws could instead be
    # generated in-kernel per block with pltpu.prng_random_bits (seeded with
    # seed + program_id) to avoid the 3*P*D*4-byte HBM stream; those
    # primitives have no CPU/interpret lowering, so we stream them here.
    u = jax.random.uniform(rng_key, (3, P, D), dtype=jnp.float32)

    nb = P // tm
    shift = nb // 2      # partner rows rotated by shift*tm (== P//2 when nb even)

    children = pl.pallas_call(
        functools.partial(_children_kernel, p_mutate=float(p_mutate),
                          p_crossover=float(p_crossover)),
        grid=(nb,),
        in_specs=[
            pl.BlockSpec((tm, D), lambda i: (i, 0)),
            pl.BlockSpec((tm, D), lambda i: ((i + shift) % nb, 0)),
            pl.BlockSpec((3, tm, D), lambda i: (0, i, 0)),
            pl.BlockSpec((3, tm, D), lambda i: (0, (i + shift) % nb, 0)),
        ],
        out_specs=pl.BlockSpec((tm, D), lambda i: (i, 0)),
        out_shape=jax.ShapeDtypeStruct((P, D), population.dtype),
        compiler_params=pltpu.CompilerParams(dimension_semantics=("parallel",)),
    )(population, population, u, u)

    return dist, children


class GeneticPallas:
    """Pallas mirror of the PyTorch `Genetic` module."""

    def __init__(self, distance_metric, p_mutate, p_crossover):
        self.distance_metric = distance_metric
        self.p_mutate = p_mutate
        self.p_crossover = p_crossover

    def search(self, cfg):
        # cfg: {'population': (P, D) float array, 'rng': jax PRNG key}
        return genetic_step(
            cfg["population"], cfg["rng"],
            p_mutate=self.p_mutate, p_crossover=self.p_crossover,
            distance_metric=self.distance_metric)

    def forward(self, cfg):
        return self.search(cfg)

    __call__ = forward


if __name__ == "__main__":
    key = jax.random.PRNGKey(0)
    kpop, krand = jax.random.split(key)
    P, D = 256, 256   # lane-dense; exercises a (2, 2, 2) distance grid at 128 tiles
    population = jax.random.normal(kpop, (P, D), dtype=jnp.float32)

    model = GeneticPallas(distance_metric="euclidean",
                          p_mutate=0.1, p_crossover=0.5)
    dist, children = model({"population": population, "rng": krand})
    jax.block_until_ready((dist, children))
    assert dist.shape == (P, P) and children.shape == (P, D)

    # ---- pure-JAX reference checks -----------------------------------------
    sq = jnp.sum(population * population, axis=1, keepdims=True)
    ref_d2 = jnp.maximum(sq + sq.T - 2.0 * population @ population.T, 0.0)
    # compare squared distances (sqrt near zero amplifies fp32 cancellation)
    assert jnp.allclose(dist * dist, ref_d2, atol=1e-2, rtol=1e-3)

    u = jax.random.uniform(krand, (3, P, D), dtype=jnp.float32)
    mutated = jnp.where(u[0] < 0.1, population + (u[1] * 2.0 - 1.0), population)
    tm = _pick_tile(P)
    shift_rows = ((P // tm) // 2) * tm
    partner = jnp.roll(mutated, -shift_rows, axis=0)
    ref_children = jnp.where(u[2] < 0.5, partner, mutated)
    assert jnp.allclose(children, ref_children, atol=1e-5)

    print("KERNEL_OK")
</pallas_src>

<mosaic_0001>
module attributes {stable_mosaic.version = 11 : i64} {
  func.func @_pairwise_dist_kernel(%arg0: i32, %arg1: i32, %arg2: i32, %arg3: memref<128x128xf32, #tpu.memory_space<vmem>>, %arg4: memref<128x128xf32, #tpu.memory_space<vmem>>, %arg5: memref<128x128xf32, #tpu.memory_space<vmem>>, %arg6: memref<128x128xf32, #tpu.memory_space<vmem>>) attributes {dimension_semantics = [#tpu.dimension_semantics<parallel>, #tpu.dimension_semantics<parallel>, #tpu.dimension_semantics<arbitrary>], iteration_bounds = array<i64: 2, 2, 2>, scalar_prefetch = 0 : i64, scratch_operands = 1 : i64, tpu.core_type = #tpu.core_type<tc>, window_params = [{transform_indices = @transform_0, window_bounds = array<i64: 128, 128>}, {transform_indices = @transform_1, window_bounds = array<i64: 128, 128>}, {transform_indices = @transform_2, window_bounds = array<i64: 128, 128>}]} {
    %c0_i32 = arith.constant 0 : i32
    %0 = arith.cmpi eq, %arg2, %c0_i32 : i32
    %1 = arith.extui %0 : i1 to i32
    %c0_i32_0 = arith.constant 0 : i32
    %2 = arith.cmpi ne, %1, %c0_i32_0 : i32
    scf.if %2 {
      %cst_12 = arith.constant 0.000000e+00 : f32
      %25 = vector.broadcast %cst_12 : f32 to vector<128x128xf32>
      %c0_13 = arith.constant 0 : index
      %c0_14 = arith.constant 0 : index
      %26 = vector.load %arg6[%c0_13, %c0_14] : memref<128x128xf32, #tpu.memory_space<vmem>>, vector<128x128xf32>
      tpu.vector_store %arg6[%c0_13, %c0_14], %25 {strides = array<i32>} : memref<128x128xf32, #tpu.memory_space<vmem>>, vector<128x128xf32>,
    } else {
    }
    %c0 = arith.constant 0 : index
    %c0_1 = arith.constant 0 : index
    %3 = vector.load %arg3[%c0, %c0_1] : memref<128x128xf32, #tpu.memory_space<vmem>>, vector<128x128xf32>
    %c0_2 = arith.constant 0 : index
    %c0_3 = arith.constant 0 : index
    %4 = vector.load %arg4[%c0_2, %c0_3] : memref<128x128xf32, #tpu.memory_space<vmem>>, vector<128x128xf32>
    %cst = arith.constant dense<0.000000e+00> : vector<128x128xf32>
    %5 = tpu.matmul %3, %4, %cst {dimension_numbers = #tpu.dot_dimension_numbers<[1], [1], [0], [0], [0, 0, 1, 0], [], []>} : vector<128x128xf32>, vector<128x128xf32>, vector<128x128xf32> -> vector<128x128xf32>
    %6 = arith.mulf %3, %3 : vector<128x128xf32>
    %cst_4 = arith.constant dense<0.000000e+00> : vector<128xf32>
    %7 = vector.multi_reduction <add>, %6, %cst_4 [1] : vector<128x128xf32> to vector<128xf32>
    %8 = vector.shape_cast %7 : vector<128xf32> to vector<128x1xf32>
    %9 = arith.mulf %4, %4 : vector<128x128xf32>
    %cst_5 = arith.constant dense<0.000000e+00> : vector<128xf32>
    %10 = vector.multi_reduction <add>, %9, %cst_5 [1] : vector<128x128xf32> to vector<128xf32>
    %11 = vector.shape_cast %10 : vector<128xf32> to vector<128x1xf32>
    %c0_6 = arith.constant 0 : index
    %c0_7 = arith.constant 0 : index
    %12 = vector.load %arg6[%c0_6, %c0_7] : memref<128x128xf32, #tpu.memory_space<vmem>>, vector<128x128xf32>
    %cst_8 = arith.constant 2.000000e+00 : f32
    %13 = vector.broadcast %cst_8 : f32 to vector<128x128xf32>
    %14 = arith.mulf %13, %5 : vector<128x128xf32>
    %15 = vector.broadcast %8 : vector<128x1xf32> to vector<128x128xf32>
    %16 = arith.subf %15, %14 : vector<128x128xf32>
    %17 = tpu.transpose %11, [1, 0] : vector<128x1xf32> -> vector<1x128xf32>
    %18 = vector.broadcast %17 : vector<1x128xf32> to vector<128x128xf32>
    %19 = arith.addf %16, %18 : vector<128x128xf32>
    %20 = arith.addf %12, %19 : vector<128x128xf32>
    %c0_9 = arith.constant 0 : index
    %c0_10 = arith.constant 0 : index
    %21 = vector.load %arg6[%c0_9, %c0_10] : memref<128x128xf32, #tpu.memory_space<vmem>>, vector<128x128xf32>
    tpu.vector_store %arg6[%c0_9, %c0_10], %20 {strides = array<i32>} : memref<128x128xf32, #tpu.memory_space<vmem>>, vector<128x128xf32>,
    %c1_i32 = arith.constant 1 : i32
    %22 = arith.cmpi eq, %arg2, %c1_i32 : i32
    %23 = arith.extui %22 : i1 to i32
    %c0_i32_11 = arith.constant 0 : i32
    %24 = arith.cmpi ne, %23, %c0_i32_11 : i32
    scf.if %24 {
      %c0_12 = arith.constant 0 : index
      %c0_13 = arith.constant 0 : index
      %25 = vector.load %arg6[%c0_12, %c0_13] : memref<128x128xf32, #tpu.memory_space<vmem>>, vector<128x128xf32>
      %cst_14 = arith.constant 0.000000e+00 : f32
      %26 = vector.broadcast %cst_14 : f32 to vector<128x128xf32>
      %27 = arith.maximumf %25, %26 : vector<128x128xf32>
      %28 = math.sqrt %27 : vector<128x128xf32>
      %c0_15 = arith.constant 0 : index
      %c0_16 = arith.constant 0 : index
      %29 = vector.load %arg5[%c0_15, %c0_16] : memref<128x128xf32, #tpu.memory_space<vmem>>, vector<128x128xf32>
      tpu.vector_store %arg5[%c0_15, %c0_16], %28 {strides = array<i32>} : memref<128x128xf32, #tpu.memory_space<vmem>>, vector<128x128xf32>,
    } else {
    }
    return
  }
  func.func @transform_0(%arg0: i32, %arg1: i32, %arg2: i32) -> (i32, i32) {
    %c0_i32 = arith.constant 0 : i32
    return %arg0, %arg2 : i32, i32
  }
  func.func @transform_1(%arg0: i32, %arg1: i32, %arg2: i32) -> (i32, i32) {
    %c0_i32 = arith.constant 0 : i32
    return %arg1, %arg2 : i32, i32
  }
  func.func @transform_2(%arg0: i32, %arg1: i32, %arg2: i32) -> (i32, i32) {
    %c0_i32 = arith.constant 0 : i32
    return %arg0, %arg1 : i32, i32
  }
}

</mosaic_0001>

<llo_original>
// kernel: tpu_custom_call.1
$region0: #{tpu_custom_call.1}
  #allocation0 [shape = 'u32[]', space=smem, size = 0x4, offset = 0x4, fixed_abs, tag = 'smem constant byte address 0x4 - core index']
  #allocation1 [shape = 'u32[72,128]{1,0:T(1,128)}', space=vmem, size = 0x9000, scoped, tag = 'internal scratch']
  #allocation2 [shape = 'f32[128,128]{1,0:T(8,128)}', space=vmem, size = 0x10000, scoped, tag = 'scratch operand']
  %s0 = inlined_call_operand.hbm [shape: f32[256,256], index: 0, kind: input, shape index: {}]
  %s1 = inlined_call_operand.hbm [shape: f32[256,256], index: 1, kind: input, shape index: {}]
  %s2 = inlined_call_operand.hbm [shape: f32[256,256], index: 2, kind: output, shape index: {}]
  %s3 = sld [smem:[#allocation0]]
  $region57: #{tpu_custom_call.1} parent=0
    _
  %s5 = ssub.s32 1, %s3
  %s6 = scalar_select 0, %s5, %s3
  $region1: #{tpu_custom_call.1} parent=0
    #allocation3 [shape = 'u8[131072]{0}', space=vmem, size = 0x20000, scoped, tag = 'input window, operand 0']
    #allocation4 [shape = 's32[2]{0}', space=sflag, size = 0x8, scoped, tag = 'scoped memory for tpu_custom_call.1']
    #allocation5 [shape = 's32[2]{0}', space=sflag, size = 0x8, scoped, tag = 'scoped memory for tpu_custom_call.1']
    #allocation6 [shape = 'u8[131072]{0}', space=vmem, size = 0x20000, scoped, tag = 'input window, operand 1']
    #allocation7 [shape = 's32[2]{0}', space=sflag, size = 0x8, scoped, tag = 'scoped memory for tpu_custom_call.1']
    #allocation8 [shape = 'u8[131072]{0}', space=vmem, size = 0x20000, scoped, tag = 'output window, operand 0']
    %7 = vsyncpa [#allocation4], 0
    %s8 = scalar_lea.sflag [#allocation4], 1
    %9 = vsyncpa %s8, 0
    %10 = vsyncpa [#allocation7], 0
    %s11 = scalar_lea.sflag [#allocation7], 1
    %12 = vsyncpa %s11, 0
    %13 = vsyncpa [#allocation5], 0
    %s14 = scalar_lea.sflag [#allocation5], 1
    %15 = vsyncpa %s14, 0
    loop: start=0, step=1, limit=10
    $region2: #{tpu_custom_call.1} parent=1 // loop_pre_header
      _
    $region3: #{tpu_custom_call.1} parent=1 // loop_header
      %s17 = sphi 0, %s21
      %p18 = scmp.ge.s32.totalorder %s17, 10
      %s24 = sphi 0, %s43
      %s25 = sphi 0, %s39
      %s26 = sphi 0, %s35
      %s27 = sphi 0, %s24
      %s28 = sphi 0, %s25
      %s29 = sphi 0, %s26
      %s30 = sphi 0, %s27
      %s31 = sphi 0, %s28
      %s32 = sphi 0, %s29
      %s48 = sphi 0, %s50
      %s51 = sphi 0, %s48
      %s52 = sphi 0, %s51
      %s68 = sphi 0, %s52
      %s76 = sphi 0, %s78
      %s79 = sphi 0, %s76
      %s80 = sphi 0, %s79
      %s96 = sphi 0, %s80
      %s104 = sphi 0, %s106
      %s107 = sphi 0, %s104
      %s108 = sphi 0, %s107
      %s124 = sphi 0, %s108
    $region4: #{tpu_custom_call.1} parent=1 // loop_header_branch
      %20 = sbr.rel (%p18) target = $region8
    $region5: #{tpu_custom_call.1} parent=1 // loop_body
      %s22 = ssub.s32 %s17, 1
      %s23 = ssub.s32 %s17, 2
      %s33 = sadd.s32 1, %s26
      %p34 = scmp.ge.s32.totalorder %s33, 2
      %s35 = scalar_select %p34, 0, %s33
      %s36 = sadd.s32 1, %s25
      %s37 = scalar_select %p34, %s36, %s25
      %p38 = scmp.ge.s32.totalorder %s37, 2
      %s39 = scalar_select %p38, 0, %s37
      %s40 = sadd.s32 1, %s24
      %s41 = scalar_select %p38, %s40, %s24
      %p42 = scmp.ge.s32.totalorder %s41, 2
      %s43 = scalar_select %p42, 0, %s41
      %s44 = ssub.s32 %s24, %s43
      %s45 = ssub.s32 %s26, %s35
      %s46 = sor.u32 %s44, %s45
      %p47 = scmp.eq.s32.totalorder %s46, 0
      %s49 = sadd.s32 %s48, 1
      %s50 = scalar_select %p47, %s48, %s49
      %p53 = pneg %p47
      %p54 = scmp.eq.s32.totalorder %s17, 7
      %p55 = por %p53, %p54
      %p56 = scmp.ne.s32.totalorder %s48, %s51
      %p57 = scmp.eq.s32.totalorder %s17, 0
      %p58 = por %p56, %p57
      %p59 = scmp.ne.s32.totalorder %s48, %s51
      %p60 = scmp.eq.s32.totalorder %s22, 7
      %p61 = por %p59, %p60
      %p62 = scmp.ne.s32.totalorder %s51, %s52
      %p63 = scmp.eq.s32.totalorder %s22, 0
      %p64 = por %p62, %p63
      %p65 = scmp.ne.s32.totalorder %s51, %s52
      %p66 = scmp.eq.s32.totalorder %s23, 7
      %p67 = por %p65, %p66
      %p69 = scmp.ne.s32.totalorder %s52, %s68
      %p70 = scmp.eq.s32.totalorder %s23, 0
      %p71 = por %p69, %p70
      %s72 = ssub.s32 %s25, %s39
      %s73 = ssub.s32 %s26, %s35
      %s74 = sor.u32 %s72, %s73
      %p75 = scmp.eq.s32.totalorder %s74, 0
      %s77 = sadd.s32 %s76, 1
      %s78 = scalar_select %p75, %s76, %s77
      %p81 = pneg %p75
      %p82 = scmp.eq.s32.totalorder %s17, 7
      %p83 = por %p81, %p82
      %p84 = scmp.ne.s32.totalorder %s76, %s79
      %p85 = scmp.eq.s32.totalorder %s17, 0
      %p86 = por %p84, %p85
      %p87 = scmp.ne.s32.totalorder %s76, %s79
      %p88 = scmp.eq.s32.totalorder %s22, 7
      %p89 = por %p87, %p88
      %p90 = scmp.ne.s32.totalorder %s79, %s80
      %p91 = scmp.eq.s32.totalorder %s22, 0
      %p92 = por %p90, %p91
      %p93 = scmp.ne.s32.totalorder %s79, %s80
      %p94 = scmp.eq.s32.totalorder %s23, 7
      %p95 = por %p93, %p94
      %p97 = scmp.ne.s32.totalorder %s80, %s96
      %p98 = scmp.eq.s32.totalorder %s23, 0
      %p99 = por %p97, %p98
      %s100 = ssub.s32 %s24, %s43
      %s101 = ssub.s32 %s25, %s39
      %s102 = sor.u32 %s100, %s101
      %p103 = scmp.eq.s32.totalorder %s102, 0
      %s105 = sadd.s32 %s104, 1
      %s106 = scalar_select %p103, %s104, %s105
      %p109 = pneg %p103
      %p110 = scmp.eq.s32.totalorder %s17, 7
      %p111 = por %p109, %p110
      %p112 = scmp.ne.s32.totalorder %s104, %s107
      %p113 = scmp.eq.s32.totalorder %s17, 0
      %p114 = por %p112, %p113
      %p115 = scmp.ne.s32.totalorder %s104, %s107
      %p116 = scmp.eq.s32.totalorder %s22, 7
      %p117 = por %p115, %p116
      %p118 = scmp.ne.s32.totalorder %s107, %s108
      %p119 = scmp.eq.s32.totalorder %s22, 0
      %p120 = por %p118, %p119
      %p121 = scmp.ne.s32.totalorder %s107, %s108
      %p122 = scmp.eq.s32.totalorder %s23, 7
      %p123 = por %p121, %p122
      %p125 = scmp.ne.s32.totalorder %s108, %s124
      %p126 = scmp.eq.s32.totalorder %s23, 0
      %p127 = por %p125, %p126
      %p128 = scmp.le.s32.totalorder 1, %s17
      %p129 = scmp.lt.s32.totalorder %s17, 9
      %p130 = pnand %p128, %p129
      %p131 = pneg %p130
      // Predicated region
      $region9: #{tpu_custom_call.1} parent=5 // pred_check
        _
      $region10: #{tpu_custom_call.1} parent=5 // pred_check_branch
        %133 = sbr.rel (%p130) target = $region12
      $region11: #{tpu_custom_call.1} parent=5 // pred_region
        %s134 = ssub.s32 %s17, 1
      $region12: #{tpu_custom_call.1} parent=5 // pred_fallthru
        _
      %p135 = scmp.lt.s32.totalorder %s17, 8
      // Predicated region
      $region13: #{tpu_custom_call.1} parent=5 // pred_check
        %p136 = pneg %p135
      $region14: #{tpu_custom_call.1} parent=5 // pred_check_branch
        %138 = sbr.rel (%p136) target = $region16
      $region15: #{tpu_custom_call.1} parent=5 // pred_region
        // Predicated region
        $region17: #{tpu_custom_call.1} parent=15 // pred_check
          %p139 = pneg %p58
        $region18: #{tpu_custom_call.1} parent=15 // pred_check_branch
          %141 = sbr.rel (%p139) target = $region20
        $region19: #{tpu_custom_call.1} parent=15 // pred_region
          %s142 = sand.u32 %s48, 1
          %s143 = scalar_lea.sflag [#allocation4], %s142
          %s144 = sand.u32 %s48, 1
          %s145 = smul.addr %s144, 128
          %s146 = scalar_lea.vmem [#allocation3], %s145
          %s147 = smul.u32 16, %s24
          %149 = vsyncadd %s143, 0
          %s150 = smul.addr %s147, 2
          %s151 = sadd.s32 %s26, %s150
          %s152 = smul.addr %s151, 8
          %s153 = scalar_lea.hbm %s0, %s152
          %s154 = sshll.u32 %s153, 4
          %s155 = int_to_ptr.hbm [resolvable:$true] %s154
          %s156 = sshll.u32 %s146, 4
          %s157 = int_to_ptr.vmem [resolvable:$true] %s156
          %162 = dma.hbm_to_vmem [thread:$0]  %s155, 2048, %s157, %s143, 256, 128, 8
        $region20: #{tpu_custom_call.1} parent=15 // pred_fallthru
          _
        // Predicated region
        $region21: #{tpu_custom_call.1} parent=15 // pred_check
          %p163 = pneg %p86
        $region22: #{tpu_custom_call.1} parent=15 // pred_check_branch
          %165 = sbr.rel (%p163) target = $region24
        $region23: #{tpu_custom_call.1} parent=15 // pred_region
          %s166 = sand.u32 %s76, 1
          %s167 = scalar_lea.sflag [#allocation7], %s166
          %s168 = sand.u32 %s76, 1
          %s169 = smul.addr %s168, 128
          %s170 = scalar_lea.vmem [#allocation6], %s169
          %s171 = smul.u32 16, %s25
          %173 = vsyncadd %s167, 0
          %s174 = smul.addr %s171, 2
          %s175 = sadd.s32 %s26, %s174
          %s176 = smul.addr %s175, 8
          %s177 = scalar_lea.hbm %s1, %s176
          %s178 = sshll.u32 %s177, 4
          %s179 = int_to_ptr.hbm [resolvable:$true] %s178
          %s180 = sshll.u32 %s170, 4
          %s181 = int_to_ptr.vmem [resolvable:$true] %s180
          %186 = dma.hbm_to_vmem [thread:$0]  %s179, 2048, %s181, %s167, 256, 128, 8
        $region24: #{tpu_custom_call.1} parent=15 // pred_fallthru
          _
      $region16: #{tpu_custom_call.1} parent=5 // pred_fallthru
        _
      %p187 = scmp.le.s32.totalorder 1, %s17
      %p188 = scmp.lt.s32.totalorder %s17, 9
      %p189 = pnand %p187, %p188
      %p190 = pneg %p189
      // Predicated region
      $region25: #{tpu_custom_call.1} parent=5 // pred_check
        _
      $region26: #{tpu_custom_call.1} parent=5 // pred_check_branch
        %192 = sbr.rel (%p189) target = $region28
      $region27: #{tpu_custom_call.1} parent=5 // pred_region
        %s193 = ssub.s32 %s17, 1
        %s194 = sand.u32 %s51, 1
        %s195 = scalar_lea.sflag [#allocation4], %s194
        %s196 = sand.u32 %s51, 1
        %s197 = smul.addr %s196, 128
        %s198 = scalar_lea.vmem [#allocation3], %s197
        // Predicated region
        $region29: #{tpu_custom_call.1} parent=27 // pred_check
          %p199 = pneg %p64
        $region30: #{tpu_custom_call.1} parent=27 // pred_check_branch
          %201 = sbr.rel (%p199) target = $region32
        $region31: #{tpu_custom_call.1} parent=27 // pred_region
          %203 = dma.done %s195, 2048
        $region32: #{tpu_custom_call.1} parent=27 // pred_fallthru
          _
        %s204 = sand.u32 %s79, 1
        %s205 = scalar_lea.sflag [#allocation7], %s204
        %s206 = sand.u32 %s79, 1
        %s207 = smul.addr %s206, 128
        %s208 = scalar_lea.vmem [#allocation6], %s207
        // Predicated region
        $region33: #{tpu_custom_call.1} parent=27 // pred_check
          %p209 = pneg %p92
        $region34: #{tpu_custom_call.1} parent=27 // pred_check_branch
          %211 = sbr.rel (%p209) target = $region36
        $region35: #{tpu_custom_call.1} parent=27 // pred_region
          %213 = dma.done %s205, 2048
        $region36: #{tpu_custom_call.1} parent=27 // pred_fallthru
          _
        %s214 = sand.u32 %s51, 1
        %s215 = scalar_lea.sflag [#allocation4], %s214
        %s216 = sand.u32 %s51, 1
        %s217 = smul.addr %s216, 128
        %s218 = scalar_lea.vmem [#allocation3], %s217
        %p219 = pneg %p64
        %p220 = pneg %p61
        %s221 = sand.u32 %s79, 1
        %s222 = scalar_lea.sflag [#allocation7], %s221
        %s223 = sand.u32 %s79, 1
        %s224 = smul.addr %s223, 128
        %s225 = scalar_lea.vmem [#allocation6], %s224
        %p226 = pneg %p92
        %p227 = pneg %p89
        %p228 = pneg %p120
        %p229 = pneg %p117
        %s230 = sand.u32 %s107, 1
        %s231 = scalar_lea.sflag [#allocation5], %s230
        %s232 = sand.u32 %s107, 1
        %s233 = smul.addr %s232, 128
        %s234 = scalar_lea.vmem [#allocation8], %s233
        %s235 = smul.u32 16, %s27
        %s236 = smul.u32 16, %s28
        %s237 = smul.u32 16, %s27
        %p238 = scmp.eq.s32.totalorder %s29, 0
        // Predicated region
        $region37: #{tpu_custom_call.1} parent=27 // pred_check
          %p239 = pneg %p238
        $region38: #{tpu_custom_call.1} parent=27 // pred_check_branch
          %241 = sbr.rel (%p239) target = $region40
        $region39: #{tpu_custom_call.1} parent=27 // pred_region
          %242 = vst [vmem:[#allocation2] sm:$0xff] 0.0
          %243 = vst [vmem:[#allocation2 + $0x8] sm:$0xff] 0.0
          %244 = vst [vmem:[#allocation2 + $0x10] sm:$0xff] 0.0
          %245 = vst [vmem:[#allocation2 + $0x18] sm:$0xff] 0.0
          %246 = vst [vmem:[#allocation2 + $0x20] sm:$0xff] 0.0
          %247 = vst [vmem:[#allocation2 + $0x28] sm:$0xff] 0.0
          %248 = vst [vmem:[#allocation2 + $0x30] sm:$0xff] 0.0
          %249 = vst [vmem:[#allocation2 + $0x38] sm:$0xff] 0.0
          %250 = vst [vmem:[#allocation2 + $0x40] sm:$0xff] 0.0
          %251 = vst [vmem:[#allocation2 + $0x48] sm:$0xff] 0.0
          %252 = vst [vmem:[#allocation2 + $0x50] sm:$0xff] 0.0
          %253 = vst [vmem:[#allocation2 + $0x58] sm:$0xff] 0.0
          %254 = vst [vmem:[#allocation2 + $0x60] sm:$0xff] 0.0
          %255 = vst [vmem:[#allocation2 + $0x68] sm:$0xff] 0.0
          %256 = vst [vmem:[#allocation2 + $0x70] sm:$0xff] 0.0
          %257 = vst [vmem:[#allocation2 + $0x78] sm:$0xff] 0.0
        $region40: #{tpu_custom_call.1} parent=27 // pred_fallthru
          _
        %v258 = vld [vmem:[%s198] sm:$0xff]
        %v259 = vld [vmem:[%s198 + $0x8] sm:$0xff]
        %v260 = vld [vmem:[%s198 + $0x10] sm:$0xff]
        %v261 = vld [vmem:[%s198 + $0x18] sm:$0xff]
        %v262 = vld [vmem:[%s198 + $0x20] sm:$0xff]
        %v263 = vld [vmem:[%s198 + $0x28] sm:$0xff]
        %v264 = vld [vmem:[%s198 + $0x30] sm:$0xff]
        %v265 = vld [vmem:[%s198 + $0x38] sm:$0xff]
        %v266 = vld [vmem:[%s198 + $0x40] sm:$0xff]
        %v267 = vld [vmem:[%s198 + $0x48] sm:$0xff]
        %v268 = vld [vmem:[%s198 + $0x50] sm:$0xff]
        %v269 = vld [vmem:[%s198 + $0x58] sm:$0xff]
        %v270 = vld [vmem:[%s198 + $0x60] sm:$0xff]
        %v271 = vld [vmem:[%s198 + $0x68] sm:$0xff]
        %v272 = vld [vmem:[%s198 + $0x70] sm:$0xff]
        %v273 = vld [vmem:[%s198 + $0x78] sm:$0xff]
        %v274 = vld [vmem:[%s208] sm:$0xff]
        %v275 = vld [vmem:[%s208 + $0x8] sm:$0xff]
        %v276 = vld [vmem:[%s208 + $0x10] sm:$0xff]
        %v277 = vld [vmem:[%s208 + $0x18] sm:$0xff]
        %v278 = vld [vmem:[%s208 + $0x20] sm:$0xff]
        %v279 = vld [vmem:[%s208 + $0x28] sm:$0xff]
        %v280 = vld [vmem:[%s208 + $0x30] sm:$0xff]
        %v281 = vld [vmem:[%s208 + $0x38] sm:$0xff]
        %v282 = vld [vmem:[%s208 + $0x40] sm:$0xff]
        %v283 = vld [vmem:[%s208 + $0x48] sm:$0xff]
        %v284 = vld [vmem:[%s208 + $0x50] sm:$0xff]
        %v285 = vld [vmem:[%s208 + $0x58] sm:$0xff]
        %v286 = vld [vmem:[%s208 + $0x60] sm:$0xff]
        %v287 = vld [vmem:[%s208 + $0x68] sm:$0xff]
        %v288 = vld [vmem:[%s208 + $0x70] sm:$0xff]
        %v289 = vld [vmem:[%s208 + $0x78] sm:$0xff]
        %290 = vmatpush.xpose.msra.mxu0 %v289
        %291 = vmatpush.xpose.msra.mxu0 %v288
        %292 = vmatpush.xpose.msra.mxu0 %v287
        %293 = vmatpush.xpose.msra.mxu0 %v286
        %294 = vmatpush.xpose.msra.mxu0 %v285
        %295 = vmatpush.xpose.msra.mxu0 %v284
        %296 = vmatpush.xpose.msra.mxu0 %v283
        %297 = vmatpush.xpose.msra.mxu0 %v282
        %298 = vmatpush.xpose.msra.mxu0 %v281
        %299 = vmatpush.xpose.msra.mxu0 %v280
        %300 = vmatpush.xpose.msra.mxu0 %v279
        %301 = vmatpush.xpose.msra.mxu0 %v278
        %302 = vmatpush.xpose.msra.mxu0 %v277
        %303 = vmatpush.xpose.msra.mxu0 %v276
        %304 = vmatpush.xpose.msra.mxu0 %v275
        %305 = vmatpush.xpose.msra.mxu0 %v274
        %306 = vmatmul.f32.gmra.mxu0 %v258
        %v307 = vpop.f32.mrf.mxu0
        %v308 = vadd.f32 0.0, %v307
        %309 = vmatmul.f32.gmra.mxu0 %v259
        %v310 = vpop.f32.mrf.mxu0
        %v311 = vadd.f32 0.0, %v310
        %312 = vmatmul.f32.gmra.mxu0 %v260
        %v313 = vpop.f32.mrf.mxu0
        %v314 = vadd.f32 0.0, %v313
        %315 = vmatmul.f32.gmra.mxu0 %v261
        %v316 = vpop.f32.mrf.mxu0
        %v317 = vadd.f32 0.0, %v316
        %318 = vmatmul.f32.gmra.mxu0 %v262
        %v319 = vpop.f32.mrf.mxu0
        %v320 = vadd.f32 0.0, %v319
        %321 = vmatmul.f32.gmra.mxu0 %v263
        %v322 = vpop.f32.mrf.mxu0
        %v323 = vadd.f32 0.0, %v322
        %324 = vmatmul.f32.gmra.mxu0 %v264
        %v325 = vpop.f32.mrf.mxu0
        %v326 = vadd.f32 0.0, %v325
        %327 = vmatmul.f32.gmra.mxu0 %v265
        %v328 = vpop.f32.mrf.mxu0
        %v329 = vadd.f32 0.0, %v328
        %330 = vmatmul.f32.gmra.mxu0 %v266
        %v331 = vpop.f32.mrf.mxu0
        %v332 = vadd.f32 0.0, %v331
        %333 = vmatmul.f32.gmra.mxu0 %v267
        %v334 = vpop.f32.mrf.mxu0
        %v335 = vadd.f32 0.0, %v334
        %336 = vmatmul.f32.gmra.mxu0 %v268
        %v337 = vpop.f32.mrf.mxu0
        %v338 = vadd.f32 0.0, %v337
        %339 = vmatmul.f32.gmra.mxu0 %v269
        %v340 = vpop.f32.mrf.mxu0
        %v341 = vadd.f32 0.0, %v340
        %342 = vmatmul.f32.gmra.mxu0 %v270
        %v343 = vpop.f32.mrf.mxu0
        %v344 = vadd.f32 0.0, %v343
        %345 = vmatmul.f32.gmra.mxu0 %v271
        %v346 = vpop.f32.mrf.mxu0
        %v347 = vadd.f32 0.0, %v346
        %348 = vmatmul.f32.gmra.mxu0 %v272
        %v349 = vpop.f32.mrf.mxu0
        %v350 = vadd.f32 0.0, %v349
        %351 = vmatmul.f32.gmra.mxu0 %v273
        %v352 = vpop.f32.mrf.mxu0
        %v353 = vadd.f32 0.0, %v352
        %354 = vdwg.mxu0
        %v355 = vmul.f32 %v258, %v258
        %v356 = vmul.f32 %v259, %v259
        %v357 = vmul.f32 %v260, %v260
        %v358 = vmul.f32 %v261, %v261
        %v359 = vmul.f32 %v262, %v262
        %v360 = vmul.f32 %v263, %v263
        %v361 = vmul.f32 %v264, %v264
        %v362 = vmul.f32 %v265, %v265
        %v363 = vmul.f32 %v266, %v266
        %v364 = vmul.f32 %v267, %v267
        %v365 = vmul.f32 %v268, %v268
        %v366 = vmul.f32 %v269, %v269
        %v367 = vmul.f32 %v270, %v270
        %v368 = vmul.f32 %v271, %v271
        %v369 = vmul.f32 %v272, %v272
        %v370 = vmul.f32 %v273, %v273
        %371 = vadd.xlane.f32.xlu0 %v355
        %v372 = vpop.xlane.xlu0 %371
        %373 = vadd.xlane.f32.xlu0 %v356
        %v374 = vpop.xlane.xlu0 %373
        %375 = vadd.xlane.f32.xlu0 %v357
        %v376 = vpop.xlane.xlu0 %375
        %377 = vadd.xlane.f32.xlu0 %v358
        %v378 = vpop.xlane.xlu0 %377
        %379 = vadd.xlane.f32.xlu0 %v359
        %v380 = vpop.xlane.xlu0 %379
        %381 = vadd.xlane.f32.xlu0 %v360
        %v382 = vpop.xlane.xlu0 %381
        %383 = vadd.xlane.f32.xlu0 %v361
        %v384 = vpop.xlane.xlu0 %383
        %385 = vadd.xlane.f32.xlu0 %v362
        %v386 = vpop.xlane.xlu0 %385
        %387 = vadd.xlane.f32.xlu0 %v363
        %v388 = vpop.xlane.xlu0 %387
        %389 = vadd.xlane.f32.xlu0 %v364
        %v390 = vpop.xlane.xlu0 %389
        %391 = vadd.xlane.f32.xlu0 %v365
        %v392 = vpop.xlane.xlu0 %391
        %393 = vadd.xlane.f32.xlu0 %v366
        %v394 = vpop.xlane.xlu0 %393
        %395 = vadd.xlane.f32.xlu0 %v367
        %v396 = vpop.xlane.xlu0 %395
        %397 = vadd.xlane.f32.xlu0 %v368
        %v398 = vpop.xlane.xlu0 %397
        %399 = vadd.xlane.f32.xlu0 %v369
        %v400 = vpop.xlane.xlu0 %399
        %401 = vadd.xlane.f32.xlu0 %v370
        %v402 = vpop.xlane.xlu0 %401
        %v403 = vmul.f32 %v274, %v274
        %v404 = vmul.f32 %v275, %v275
        %v405 = vmul.f32 %v276, %v276
        %v406 = vmul.f32 %v277, %v277
        %v407 = vmul.f32 %v278, %v278
        %v408 = vmul.f32 %v279, %v279
        %v409 = vmul.f32 %v280, %v280
        %v410 = vmul.f32 %v281, %v281
        %v411 = vmul.f32 %v282, %v282
        %v412 = vmul.f32 %v283, %v283
        %v413 = vmul.f32 %v284, %v284
        %v414 = vmul.f32 %v285, %v285
        %v415 = vmul.f32 %v286, %v286
        %v416 = vmul.f32 %v287, %v287
        %v417 = vmul.f32 %v288, %v288
        %v418 = vmul.f32 %v289, %v289
        %419 = vadd.xlane.f32.xlu0 %v403
        %v420 = vpop.xlane.xlu0 %419
        %421 = vadd.xlane.f32.xlu0 %v404
        %v422 = vpop.xlane.xlu0 %421
        %423 = vadd.xlane.f32.xlu0 %v405
        %v424 = vpop.xlane.xlu0 %423
        %425 = vadd.xlane.f32.xlu0 %v406
        %v426 = vpop.xlane.xlu0 %425
        %427 = vadd.xlane.f32.xlu0 %v407
        %v428 = vpop.xlane.xlu0 %427
        %429 = vadd.xlane.f32.xlu0 %v408
        %v430 = vpop.xlane.xlu0 %429
        %431 = vadd.xlane.f32.xlu0 %v409
        %v432 = vpop.xlane.xlu0 %431
        %433 = vadd.xlane.f32.xlu0 %v410
        %v434 = vpop.xlane.xlu0 %433
        %435 = vadd.xlane.f32.xlu0 %v411
        %v436 = vpop.xlane.xlu0 %435
        %437 = vadd.xlane.f32.xlu0 %v412
        %v438 = vpop.xlane.xlu0 %437
        %439 = vadd.xlane.f32.xlu0 %v413
        %v440 = vpop.xlane.xlu0 %439
        %441 = vadd.xlane.f32.xlu0 %v414
        %v442 = vpop.xlane.xlu0 %441
        %443 = vadd.xlane.f32.xlu0 %v415
        %v444 = vpop.xlane.xlu0 %443
        %445 = vadd.xlane.f32.xlu0 %v416
        %v446 = vpop.xlane.xlu0 %445
        %447 = vadd.xlane.f32.xlu0 %v417
        %v448 = vpop.xlane.xlu0 %447
        %449 = vadd.xlane.f32.xlu0 %v418
        %v450 = vpop.xlane.xlu0 %449
        %v451 = vld [vmem:[#allocation2] sm:$0xff]
        %v452 = vld [vmem:[#allocation2 + $0x8] sm:$0xff]
        %v453 = vld [vmem:[#allocation2 + $0x10] sm:$0xff]
        %v454 = vld [vmem:[#allocation2 + $0x18] sm:$0xff]
        %v455 = vld [vmem:[#allocation2 + $0x20] sm:$0xff]
        %v456 = vld [vmem:[#allocation2 + $0x28] sm:$0xff]
        %v457 = vld [vmem:[#allocation2 + $0x30] sm:$0xff]
        %v458 = vld [vmem:[#allocation2 + $0x38] sm:$0xff]
        %v459 = vld [vmem:[#allocation2 + $0x40] sm:$0xff]
        %v460 = vld [vmem:[#allocation2 + $0x48] sm:$0xff]
        %v461 = vld [vmem:[#allocation2 + $0x50] sm:$0xff]
        %v462 = vld [vmem:[#allocation2 + $0x58] sm:$0xff]
        %v463 = vld [vmem:[#allocation2 + $0x60] sm:$0xff]
        %v464 = vld [vmem:[#allocation2 + $0x68] sm:$0xff]
        %v465 = vld [vmem:[#allocation2 + $0x70] sm:$0xff]
        %v466 = vld [vmem:[#allocation2 + $0x78] sm:$0xff]
        %v467 = vmul.f32 %v308, 2.0
        %v468 = vmul.f32 %v311, 2.0
        %v469 = vmul.f32 %v314, 2.0
        %v470 = vmul.f32 %v317, 2.0
        %v471 = vmul.f32 %v320, 2.0
        %v472 = vmul.f32 %v323, 2.0
        %v473 = vmul.f32 %v326, 2.0
        %v474 = vmul.f32 %v329, 2.0
        %v475 = vmul.f32 %v332, 2.0
        %v476 = vmul.f32 %v335, 2.0
        %v477 = vmul.f32 %v338, 2.0
        %v478 = vmul.f32 %v341, 2.0
        %v479 = vmul.f32 %v344, 2.0
        %v480 = vmul.f32 %v347, 2.0
        %v481 = vmul.f32 %v350, 2.0
        %v482 = vmul.f32 %v353, 2.0
        %v483 = vsub.f32 %v372, %v467
        %v484 = vsub.f32 %v374, %v468
        %v485 = vsub.f32 %v376, %v469
        %v486 = vsub.f32 %v378, %v470
        %v487 = vsub.f32 %v380, %v471
        %v488 = vsub.f32 %v382, %v472
        %v489 = vsub.f32 %v384, %v473
        %v490 = vsub.f32 %v386, %v474
        %v491 = vsub.f32 %v388, %v475
        %v492 = vsub.f32 %v390, %v476
        %v493 = vsub.f32 %v392, %v477
        %v494 = vsub.f32 %v394, %v478
        %v495 = vsub.f32 %v396, %v479
        %v496 = vsub.f32 %v398, %v480
        %v497 = vsub.f32 %v400, %v481
        %v498 = vsub.f32 %v402, %v482
        %499 = vxpose.xlu0.b32.start [1/16] %v420, 128
        %500 = vxpose.xlu0.b32.cont [2/16] %v422, 128
        %501 = vxpose.xlu0.b32.cont [3/16] %v424, 128
        %502 = vxpose.xlu0.b32.cont [4/16] %v426, 128
        %503 = vxpose.xlu0.b32.cont [5/16] %v428, 128
        %504 = vxpose.xlu0.b32.cont [6/16] %v430, 128
        %505 = vxpose.xlu0.b32.cont [7/16] %v432, 128
        %506 = vxpose.xlu0.b32.cont [8/16] %v434, 128
        %507 = vxpose.xlu0.b32.cont [9/16] %v436, 128
        %508 = vxpose.xlu0.b32.cont [10/16] %v438, 128
        %509 = vxpose.xlu0.b32.cont [11/16] %v440, 128
        %510 = vxpose.xlu0.b32.cont [12/16] %v442, 128
        %511 = vxpose.xlu0.b32.cont [13/16] %v444, 128
        %512 = vxpose.xlu0.b32.cont [14/16] %v446, 128
        %513 = vxpose.xlu0.b32.cont [15/16] %v448, 128
        %514 = vxpose.xlu0.b32.end [16/16] %v450, 128
        %v515 = vpop.trf.xlu0
        %v516 = vpop.trf.xlu0
        %v517 = vpop.trf.xlu0
        %v518 = vpop.trf.xlu0
        %v519 = vpop.trf.xlu0
        %v520 = vpop.trf.xlu0
        %v521 = vpop.trf.xlu0
        %v522 = vpop.trf.xlu0
        %v523 = vpop.trf.xlu0
        %v524 = vpop.trf.xlu0
        %v525 = vpop.trf.xlu0
        %v526 = vpop.trf.xlu0
        %v527 = vpop.trf.xlu0
        %v528 = vpop.trf.xlu0
        %v529 = vpop.trf.xlu0
        %v530 = vpop.trf.xlu0
        %v531 = vperm.slane %v515, 0
        %v532 = vadd.f32 %v483, %v531
        %v533 = vadd.f32 %v484, %v531
        %v534 = vadd.f32 %v485, %v531
        %v535 = vadd.f32 %v486, %v531
        %v536 = vadd.f32 %v487, %v531
        %v537 = vadd.f32 %v488, %v531
        %v538 = vadd.f32 %v489, %v531
        %v539 = vadd.f32 %v490, %v531
        %v540 = vadd.f32 %v491, %v531
        %v541 = vadd.f32 %v492, %v531
        %v542 = vadd.f32 %v493, %v531
        %v543 = vadd.f32 %v494, %v531
        %v544 = vadd.f32 %v495, %v531
        %v545 = vadd.f32 %v496, %v531
        %v546 = vadd.f32 %v497, %v531
        %v547 = vadd.f32 %v498, %v531
        %v548 = vadd.f32 %v451, %v532
        %v549 = vadd.f32 %v452, %v533
        %v550 = vadd.f32 %v453, %v534
        %v551 = vadd.f32 %v454, %v535
        %v552 = vadd.f32 %v455, %v536
        %v553 = vadd.f32 %v456, %v537
        %v554 = vadd.f32 %v457, %v538
        %v555 = vadd.f32 %v458, %v539
        %v556 = vadd.f32 %v459, %v540
        %v557 = vadd.f32 %v460, %v541
        %v558 = vadd.f32 %v461, %v542
        %v559 = vadd.f32 %v462, %v543
        %v560 = vadd.f32 %v463, %v544
        %v561 = vadd.f32 %v464, %v545
        %v562 = vadd.f32 %v465, %v546
        %v563 = vadd.f32 %v466, %v547
        %564 = vst [vmem:[#allocation2] sm:$0xff] %v548
        %565 = vst [vmem:[#allocation2 + $0x8] sm:$0xff] %v549
        %566 = vst [vmem:[#allocation2 + $0x10] sm:$0xff] %v550
        %567 = vst [vmem:[#allocation2 + $0x18] sm:$0xff] %v551
        %568 = vst [vmem:[#allocation2 + $0x20] sm:$0xff] %v552
        %569 = vst [vmem:[#allocation2 + $0x28] sm:$0xff] %v553
        %570 = vst [vmem:[#allocation2 + $0x30] sm:$0xff] %v554
        %571 = vst [vmem:[#allocation2 + $0x38] sm:$0xff] %v555
        %572 = vst [vmem:[#allocation2 + $0x40] sm:$0xff] %v556
        %573 = vst [vmem:[#allocation2 + $0x48] sm:$0xff] %v557
        %574 = vst [vmem:[#allocation2 + $0x50] sm:$0xff] %v558
        %575 = vst [vmem:[#allocation2 + $0x58] sm:$0xff] %v559
        %576 = vst [vmem:[#allocation2 + $0x60] sm:$0xff] %v560
        %577 = vst [vmem:[#allocation2 + $0x68] sm:$0xff] %v561
        %578 = vst [vmem:[#allocation2 + $0x70] sm:$0xff] %v562
        %579 = vst [vmem:[#allocation2 + $0x78] sm:$0xff] %v563
        %p580 = scmp.eq.s32.totalorder %s29, 1
        // Predicated region
        $region41: #{tpu_custom_call.1} parent=27 // pred_check
          %p581 = pneg %p580
        $region42: #{tpu_custom_call.1} parent=27 // pred_check_branch
          %583 = sbr.rel (%p581) target = $region44
        $region43: #{tpu_custom_call.1} parent=27 // pred_region
          %v584 = vld [vmem:[#allocation2] sm:$0xff]
          %v585 = vld [vmem:[#allocation2 + $0x8] sm:$0xff]
          %v586 = vld [vmem:[#allocation2 + $0x10] sm:$0xff]
          %v587 = vld [vmem:[#allocation2 + $0x18] sm:$0xff]
          %v588 = vld [vmem:[#allocation2 + $0x20] sm:$0xff]
          %v589 = vld [vmem:[#allocation2 + $0x28] sm:$0xff]
          %v590 = vld [vmem:[#allocation2 + $0x30] sm:$0xff]
          %v591 = vld [vmem:[#allocation2 + $0x38] sm:$0xff]
          %v592 = vld [vmem:[#allocation2 + $0x40] sm:$0xff]
          %v593 = vld [vmem:[#allocation2 + $0x48] sm:$0xff]
          %v594 = vld [vmem:[#allocation2 + $0x50] sm:$0xff]
          %v595 = vld [vmem:[#allocation2 + $0x58] sm:$0xff]
          %v596 = vld [vmem:[#allocation2 + $0x60] sm:$0xff]
          %v597 = vld [vmem:[#allocation2 + $0x68] sm:$0xff]
          %v598 = vld [vmem:[#allocation2 + $0x70] sm:$0xff]
          %v599 = vld [vmem:[#allocation2 + $0x78] sm:$0xff]
          %v600 = vmax.f32 %v584, 0.0
          %v601 = vmax.f32 %v585, 0.0
          %v602 = vmax.f32 %v586, 0.0
          %v603 = vmax.f32 %v587, 0.0
          %v604 = vmax.f32 %v588, 0.0
          %v605 = vmax.f32 %v589, 0.0
          %v606 = vmax.f32 %v590, 0.0
          %v607 = vmax.f32 %v591, 0.0
          %v608 = vmax.f32 %v592, 0.0
          %v609 = vmax.f32 %v593, 0.0
          %v610 = vmax.f32 %v594, 0.0
          %v611 = vmax.f32 %v595, 0.0
          %v612 = vmax.f32 %v596, 0.0
          %v613 = vmax.f32 %v597, 0.0
          %v614 = vmax.f32 %v598, 0.0
          %v615 = vmax.f32 %v599, 0.0
          %v616 = vrsqrt.pop %v600
          %v617 = vmul.f32 %v616, %v600
          %v618 = vmul.f32 %v617, %v616
          %v619 = vmul.f32 0.5, %v618
          %v620 = vsub.f32 1.5, %v619
          %v621 = vmul.f32 %v616, %v620
          %v622 = vmul.f32 %v600, %v621
          %vm623 = vcmp.eq.f32.partialorder %v600, inf
          %v624 = vsel %vm623, %v600, %v622
          %vm625 = vcmp.eq.f32.partialorder %v600, 0.0
          %v626 = vand.u32 %v600, 2147483648
          %v627 = vsel %vm625, %v626, %v624
          %v628 = vrsqrt.pop %v601
          %v629 = vmul.f32 %v628, %v601
          %v630 = vmul.f32 %v629, %v628
          %v631 = vmul.f32 0.5, %v630
          %v632 = vsub.f32 1.5, %v631
          %v633 = vmul.f32 %v628, %v632
          %v634 = vmul.f32 %v601, %v633
          %vm635 = vcmp.eq.f32.partialorder %v601, inf
          %v636 = vsel %vm635, %v601, %v634
          %vm637 = vcmp.eq.f32.partialorder %v601, 0.0
          %v638 = vand.u32 %v601, 2147483648
          %v639 = vsel %vm637, %v638, %v636
          %v640 = vrsqrt.pop %v602
          %v641 = vmul.f32 %v640, %v602
          %v642 = vmul.f32 %v641, %v640
          %v643 = vmul.f32 0.5, %v642
          %v644 = vsub.f32 1.5, %v643
          %v645 = vmul.f32 %v640, %v644
          %v646 = vmul.f32 %v602, %v645
          %vm647 = vcmp.eq.f32.partialorder %v602, inf
          %v648 = vsel %vm647, %v602, %v646
          %vm649 = vcmp.eq.f32.partialorder %v602, 0.0
          %v650 = vand.u32 %v602, 2147483648
          %v651 = vsel %vm649, %v650, %v648
          %v652 = vrsqrt.pop %v603
          %v653 = vmul.f32 %v652, %v603
          %v654 = vmul.f32 %v653, %v652
          %v655 = vmul.f32 0.5, %v654
          %v656 = vsub.f32 1.5, %v655
          %v657 = vmul.f32 %v652, %v656
          %v658 = vmul.f32 %v603, %v657
          %vm659 = vcmp.eq.f32.partialorder %v603, inf
          %v660 = vsel %vm659, %v603, %v658
          %vm661 = vcmp.eq.f32.partialorder %v603, 0.0
          %v662 = vand.u32 %v603, 2147483648
          %v663 = vsel %vm661, %v662, %v660
          %v664 = vrsqrt.pop %v604
          %v665 = vmul.f32 %v664, %v604
          %v666 = vmul.f32 %v665, %v664
          %v667 = vmul.f32 0.5, %v666
          %v668 = vsub.f32 1.5, %v667
          %v669 = vmul.f32 %v664, %v668
          %v670 = vmul.f32 %v604, %v669
          %vm671 = vcmp.eq.f32.partialorder %v604, inf
          %v672 = vsel %vm671, %v604, %v670
          %vm673 = vcmp.eq.f32.partialorder %v604, 0.0
          %v674 = vand.u32 %v604, 2147483648
          %v675 = vsel %vm673, %v674, %v672
          %v676 = vrsqrt.pop %v605
          %v677 = vmul.f32 %v676, %v605
          %v678 = vmul.f32 %v677, %v676
          %v679 = vmul.f32 0.5, %v678
          %v680 = vsub.f32 1.5, %v679
          %v681 = vmul.f32 %v676, %v680
          %v682 = vmul.f32 %v605, %v681
          %vm683 = vcmp.eq.f32.partialorder %v605, inf
          %v684 = vsel %vm683, %v605, %v682
          %vm685 = vcmp.eq.f32.partialorder %v605, 0.0
          %v686 = vand.u32 %v605, 2147483648
          %v687 = vsel %vm685, %v686, %v684
          %v688 = vrsqrt.pop %v606
          %v689 = vmul.f32 %v688, %v606
          %v690 = vmul.f32 %v689, %v688
          %v691 = vmul.f32 0.5, %v690
          %v692 = vsub.f32 1.5, %v691
          %v693 = vmul.f32 %v688, %v692
          %v694 = vmul.f32 %v606, %v693
          %vm695 = vcmp.eq.f32.partialorder %v606, inf
          %v696 = vsel %vm695, %v606, %v694
          %vm697 = vcmp.eq.f32.partialorder %v606, 0.0
          %v698 = vand.u32 %v606, 2147483648
          %v699 = vsel %vm697, %v698, %v696
          %v700 = vrsqrt.pop %v607
          %v701 = vmul.f32 %v700, %v607
          %v702 = vmul.f32 %v701, %v700
          %v703 = vmul.f32 0.5, %v702
          %v704 = vsub.f32 1.5, %v703
          %v705 = vmul.f32 %v700, %v704
          %v706 = vmul.f32 %v607, %v705
          %vm707 = vcmp.eq.f32.partialorder %v607, inf
          %v708 = vsel %vm707, %v607, %v706
          %vm709 = vcmp.eq.f32.partialorder %v607, 0.0
          %v710 = vand.u32 %v607, 2147483648
          %v711 = vsel %vm709, %v710, %v708
          %v712 = vrsqrt.pop %v608
          %v713 = vmul.f32 %v712, %v608
          %v714 = vmul.f32 %v713, %v712
          %v715 = vmul.f32 0.5, %v714
          %v716 = vsub.f32 1.5, %v715
          %v717 = vmul.f32 %v712, %v716
          %v718 = vmul.f32 %v608, %v717
          %vm719 = vcmp.eq.f32.partialorder %v608, inf
          %v720 = vsel %vm719, %v608, %v718
          %vm721 = vcmp.eq.f32.partialorder %v608, 0.0
          %v722 = vand.u32 %v608, 2147483648
          %v723 = vsel %vm721, %v722, %v720
          %v724 = vrsqrt.pop %v609
          %v725 = vmul.f32 %v724, %v609
          %v726 = vmul.f32 %v725, %v724
          %v727 = vmul.f32 0.5, %v726
          %v728 = vsub.f32 1.5, %v727
          %v729 = vmul.f32 %v724, %v728
          %v730 = vmul.f32 %v609, %v729
          %vm731 = vcmp.eq.f32.partialorder %v609, inf
          %v732 = vsel %vm731, %v609, %v730
          %vm733 = vcmp.eq.f32.partialorder %v609, 0.0
          %v734 = vand.u32 %v609, 2147483648
          %v735 = vsel %vm733, %v734, %v732
          %v736 = vrsqrt.pop %v610
          %v737 = vmul.f32 %v736, %v610
          %v738 = vmul.f32 %v737, %v736
          %v739 = vmul.f32 0.5, %v738
          %v740 = vsub.f32 1.5, %v739
          %v741 = vmul.f32 %v736, %v740
          %v742 = vmul.f32 %v610, %v741
          %vm743 = vcmp.eq.f32.partialorder %v610, inf
          %v744 = vsel %vm743, %v610, %v742
          %vm745 = vcmp.eq.f32.partialorder %v610, 0.0
          %v746 = vand.u32 %v610, 2147483648
          %v747 = vsel %vm745, %v746, %v744
          %v748 = vrsqrt.pop %v611
          %v749 = vmul.f32 %v748, %v611
          %v750 = vmul.f32 %v749, %v748
          %v751 = vmul.f32 0.5, %v750
          %v752 = vsub.f32 1.5, %v751
          %v753 = vmul.f32 %v748, %v752
          %v754 = vmul.f32 %v611, %v753
          %vm755 = vcmp.eq.f32.partialorder %v611, inf
          %v756 = vsel %vm755, %v611, %v754
          %vm757 = vcmp.eq.f32.partialorder %v611, 0.0
          %v758 = vand.u32 %v611, 2147483648
          %v759 = vsel %vm757, %v758, %v756
          %v760 = vrsqrt.pop %v612
          %v761 = vmul.f32 %v760, %v612
          %v762 = vmul.f32 %v761, %v760
          %v763 = vmul.f32 0.5, %v762
          %v764 = vsub.f32 1.5, %v763
          %v765 = vmul.f32 %v760, %v764
          %v766 = vmul.f32 %v612, %v765
          %vm767 = vcmp.eq.f32.partialorder %v612, inf
          %v768 = vsel %vm767, %v612, %v766
          %vm769 = vcmp.eq.f32.partialorder %v612, 0.0
          %v770 = vand.u32 %v612, 2147483648
          %v771 = vsel %vm769, %v770, %v768
          %v772 = vrsqrt.pop %v613
          %v773 = vmul.f32 %v772, %v613
          %v774 = vmul.f32 %v773, %v772
          %v775 = vmul.f32 0.5, %v774
          %v776 = vsub.f32 1.5, %v775
          %v777 = vmul.f32 %v772, %v776
          %v778 = vmul.f32 %v613, %v777
          %vm779 = vcmp.eq.f32.partialorder %v613, inf
          %v780 = vsel %vm779, %v613, %v778
          %vm781 = vcmp.eq.f32.partialorder %v613, 0.0
          %v782 = vand.u32 %v613, 2147483648
          %v783 = vsel %vm781, %v782, %v780
          %v784 = vrsqrt.pop %v614
          %v785 = vmul.f32 %v784, %v614
          %v786 = vmul.f32 %v785, %v784
          %v787 = vmul.f32 0.5, %v786
          %v788 = vsub.f32 1.5, %v787
          %v789 = vmul.f32 %v784, %v788
          %v790 = vmul.f32 %v614, %v789
          %vm791 = vcmp.eq.f32.partialorder %v614, inf
          %v792 = vsel %vm791, %v614, %v790
          %vm793 = vcmp.eq.f32.partialorder %v614, 0.0
          %v794 = vand.u32 %v614, 2147483648
          %v795 = vsel %vm793, %v794, %v792
          %v796 = vrsqrt.pop %v615
          %v797 = vmul.f32 %v796, %v615
          %v798 = vmul.f32 %v797, %v796
          %v799 = vmul.f32 0.5, %v798
          %v800 = vsub.f32 1.5, %v799
          %v801 = vmul.f32 %v796, %v800
          %v802 = vmul.f32 %v615, %v801
          %vm803 = vcmp.eq.f32.partialorder %v615, inf
          %v804 = vsel %vm803, %v615, %v802
          %vm805 = vcmp.eq.f32.partialorder %v615, 0.0
          %v806 = vand.u32 %v615, 2147483648
          %v807 = vsel %vm805, %v806, %v804
          %808 = vst [vmem:[%s234] sm:$0xff] %v627
          %809 = vst [vmem:[%s234 + $0x8] sm:$0xff] %v639
          %810 = vst [vmem:[%s234 + $0x10] sm:$0xff] %v651
          %811 = vst [vmem:[%s234 + $0x18] sm:$0xff] %v663
          %812 = vst [vmem:[%s234 + $0x20] sm:$0xff] %v675
          %813 = vst [vmem:[%s234 + $0x28] sm:$0xff] %v687
          %814 = vst [vmem:[%s234 + $0x30] sm:$0xff] %v699
          %815 = vst [vmem:[%s234 + $0x38] sm:$0xff] %v711
          %816 = vst [vmem:[%s234 + $0x40] sm:$0xff] %v723
          %817 = vst [vmem:[%s234 + $0x48] sm:$0xff] %v735
          %818 = vst [vmem:[%s234 + $0x50] sm:$0xff] %v747
          %819 = vst [vmem:[%s234 + $0x58] sm:$0xff] %v759
          %820 = vst [vmem:[%s234 + $0x60] sm:$0xff] %v771
          %821 = vst [vmem:[%s234 + $0x68] sm:$0xff] %v783
          %822 = vst [vmem:[%s234 + $0x70] sm:$0xff] %v795
          %823 = vst [vmem:[%s234 + $0x78] sm:$0xff] %v807
        $region44: #{tpu_custom_call.1} parent=27 // pred_fallthru
          _
        %s824 = sand.u32 %s107, 1
        %s825 = scalar_lea.sflag [#allocation5], %s824
        %s826 = sand.u32 %s107, 1
        %s827 = smul.addr %s826, 128
        %s828 = scalar_lea.vmem [#allocation8], %s827
        // Predicated region
        $region45: #{tpu_custom_call.1} parent=27 // pred_check
          %p829 = pneg %p117
        $region46: #{tpu_custom_call.1} parent=27 // pred_check_branch
          %831 = sbr.rel (%p829) target = $region48
        $region47: #{tpu_custom_call.1} parent=27 // pred_region
          %s832 = smul.u32 16, %s27
          %834 = vsyncadd %s825, 0
          %s835 = smul.addr %s832, 2
          %s836 = sadd.s32 %s28, %s835
          %s837 = smul.addr %s836, 8
          %s838 = scalar_lea.hbm %s2, %s837
          %s839 = sshll.u32 %s828, 4
          %s840 = int_to_ptr.vmem [resolvable:$true] %s839
          %s841 = sshll.u32 %s838, 4
          %s842 = int_to_ptr.hbm [resolvable:$true] %s841
          %847 = dma.vmem_to_hbm [thread:$0]  %s840, 2048, %s842, %s825, 128, 256, 8
        $region48: #{tpu_custom_call.1} parent=27 // pred_fallthru
          _
      $region28: #{tpu_custom_call.1} parent=5 // pred_fallthru
        _
      %p848 = scmp.le.s32.totalorder 2, %s17
      // Predicated region
      $region49: #{tpu_custom_call.1} parent=5 // pred_check
        %p849 = pneg %p848
      $region50: #{tpu_custom_call.1} parent=5 // pred_check_branch
        %851 = sbr.rel (%p849) target = $region52
      $region51: #{tpu_custom_call.1} parent=5 // pred_region
        %s852 = ssub.s32 %s17, 2
        // Predicated region
        $region53: #{tpu_custom_call.1} parent=51 // pred_check
          %p853 = pneg %p123
        $region54: #{tpu_custom_call.1} parent=51 // pred_check_branch
          %855 = sbr.rel (%p853) target = $region56
        $region55: #{tpu_custom_call.1} parent=51 // pred_region
          %s856 = sand.u32 %s108, 1
          %s857 = scalar_lea.sflag [#allocation5], %s856
          %s858 = sand.u32 %s108, 1
          %s859 = smul.addr %s858, 128
          %s860 = scalar_lea.vmem [#allocation8], %s859
          %862 = dma.done %s857, 2048
        $region56: #{tpu_custom_call.1} parent=51 // pred_fallthru
          _
      $region52: #{tpu_custom_call.1} parent=5 // pred_fallthru
        _
    $region6: #{tpu_custom_call.1} parent=1 // loop_footer
      %s21 = sadd.s32 1, %s17
    $region7: #{tpu_custom_call.1} parent=1 // loop_footer_branch
      %16 = sbr.rel target = $region3
    $region8: #{tpu_custom_call.1} parent=1 // loop_exit
      _
    %863 = vsyncpa [#allocation4], 1
    %s864 = scalar_lea.sflag [#allocation4], 1
    %865 = vsyncpa %s864, 1
    %866 = vsyncpa [#allocation7], 1
    %s867 = scalar_lea.sflag [#allocation7], 1
    %868 = vsyncpa %s867, 1
    %869 = vsyncpa [#allocation5], 1
    %s870 = scalar_lea.sflag [#allocation5], 1
    %871 = vsyncpa %s870, 1

</llo_original>
